<compile_context>
chip_gen: v5e
topology: v5e:2x2
jax: 0.10.0
libtpu: 0.0.40
codegen_flags: <defaults>
</compile_context>

<pallas_src>
import math
import jax
import jax.numpy as jnp
from jax.experimental import pallas as pl
from jax.experimental.pallas import tpu as pltpu

# ----- hyperparameters the reference module pulls from module globals -----
SIGMA_ZERO = 0.5
V_MIN, V_MAX = -10.0, 10.0
NUM_SUPPORT = 8          # kept small for this synthetic test
NUM_INPUTS = 8
NUM_OUTPUTS = 4
HIDDEN = 49              # fixed by the reference module (fc: num_inputs -> 49)
BATCH = 2


def _qnet_kernel(x_ref, wfc_ref, bfc_ref, wz_ref, bz_ref, g_ref, gt_ref, out_ref):
    x = x_ref[...]                                              # (B, num_inputs)

    # hidden = relu(x @ W_fc + b_fc)                            -> (B, 49)
    h = jnp.dot(x, wfc_ref[...], preferred_element_type=jnp.float32)
    h = jnp.maximum(h + bfc_ref[...], 0.0)

    # Dueling combine pre-folded into the weights on the host:
    # z = h @ W_z + b_z  gives  val + (adv - mean_a(adv))  directly, flat
    # action-major layout (B, A*S).
    z = jnp.dot(h, wz_ref[...], preferred_element_type=jnp.float32)
    z = z + bz_ref[...]                                         # (B, A*S)

    # Per-action-group softmax over the support axis.  One row-wise max is a
    # valid shift for every group (softmax is shift-invariant per group).
    m = jnp.max(z, axis=-1, keepdims=True)                      # (B, 1)
    e = jnp.exp(z - m)                                          # (B, A*S)

    # Group reduce + broadcast on the (idle) MXU via constant 0/1 matrices.
    denom = jnp.dot(e, g_ref[...], preferred_element_type=jnp.float32)   # (B, A)
    inv = pl.reciprocal(denom, approx=False)                    # exact: keeps 1e-5 tol
    inv_b = jnp.dot(inv, gt_ref[...], preferred_element_type=jnp.float32)  # (B, A*S)

    out_ref[...] = e * inv_b                                    # single lane-dense store


def qnet_forward(x, kernel_params):
    """x: (B, num_inputs) f32 -> p: (B, num_outputs, num_support) f32."""
    wfc, bfc, wz, bz, g, gt = kernel_params
    B = x.shape[0]
    vmem = pl.BlockSpec(memory_space=pltpu.MemorySpace.VMEM)
    flat = pl.pallas_call(
        _qnet_kernel,
        out_shape=jax.ShapeDtypeStruct((B, NUM_OUTPUTS * NUM_SUPPORT), jnp.float32),
        in_specs=[vmem] * 7,   # x, W_fc, b_fc, W_z, b_z, G, G^T  (all tiny, VMEM-resident)
        out_specs=vmem,
    )(x, wfc, bfc, wz, bz, g, gt)
    return flat.reshape(B, NUM_OUTPUTS, NUM_SUPPORT)


# ------------------------- deterministic parameter init -------------------------
def _xavier_uniform(key, out_f, in_f):
    bound = math.sqrt(6.0 / (in_f + out_f))
    return jax.random.uniform(key, (out_f, in_f), jnp.float32, -bound, bound)


def _scale_noise(key, size):
    x = jax.random.normal(key, (size,), jnp.float32)
    return jnp.sign(x) * jnp.sqrt(jnp.abs(x))


def init_raw_params(key):
    """Raw (torch-layout) effective weights, NoisyLinear noise already folded in."""
    k = jax.random.split(key, 8)

    # fc: Linear(num_inputs, 49), xavier_uniform weight, default uniform bias
    w_fc = _xavier_uniform(k[0], HIDDEN, NUM_INPUTS)            # (49, in)
    b_fc = jax.random.uniform(k[1], (HIDDEN,), jnp.float32,
                              -1.0 / math.sqrt(NUM_INPUTS), 1.0 / math.sqrt(NUM_INPUTS))

    # fc_val: Linear(49, num_support), xavier_uniform weight
    w_val = _xavier_uniform(k[2], NUM_SUPPORT, HIDDEN)          # (S, 49)
    b_val = jax.random.uniform(k[3], (NUM_SUPPORT,), jnp.float32,
                               -1.0 / math.sqrt(HIDDEN), 1.0 / math.sqrt(HIDDEN))

    # fc_adv: NoisyLinear(49, num_outputs * num_support)
    adv_out = NUM_OUTPUTS * NUM_SUPPORT
    mu_range = 1.0 / math.sqrt(HIDDEN)
    w_mu = jax.random.uniform(k[4], (adv_out, HIDDEN), jnp.float32, -mu_range, mu_range)
    w_sigma = jnp.full((adv_out, HIDDEN), SIGMA_ZERO / math.sqrt(HIDDEN), jnp.float32)
    b_mu = jax.random.uniform(k[5], (adv_out,), jnp.float32, -mu_range, mu_range)
    b_sigma = jnp.full((adv_out,), SIGMA_ZERO / math.sqrt(adv_out), jnp.float32)
    eps_in = _scale_noise(k[6], HIDDEN)
    eps_out = _scale_noise(k[7], adv_out)

    # NoisyLinear.forward: W = mu + sigma * eps, b = mu + sigma * eps
    w_adv_eff = w_mu + w_sigma * jnp.outer(eps_out, eps_in)     # (A*S, 49)
    b_adv_eff = b_mu + b_sigma * eps_out                        # (A*S,)

    return (w_fc, b_fc, w_adv_eff, b_adv_eff, w_val, b_val)


def _dueling_fold_matrix(A, S):
    """D (S + A*S, A*S):  heads @ D == val + (adv - mean_a(adv)), flat layout."""
    eye_s = jnp.eye(S, dtype=jnp.float32)
    val_block = jnp.tile(eye_s, (1, A))                          # (S, A*S)
    adv_block = jnp.kron(jnp.eye(A, dtype=jnp.float32) - 1.0 / A, eye_s)  # (A*S, A*S)
    return jnp.concatenate([val_block, adv_block], axis=0)


def _group_matrix(A, S):
    """G (A*S, A) with G[a*S+s, a] = 1 (action-group membership)."""
    return jnp.kron(jnp.eye(A, dtype=jnp.float32), jnp.ones((S, 1), jnp.float32))


def pack_kernel_params(raw):
    """Pre-transpose, fuse heads, and fold the dueling combine on the host."""
    w_fc, b_fc, w_adv, b_adv, w_val, b_val = raw
    A, S = NUM_OUTPUTS, NUM_SUPPORT

    wfc = jnp.transpose(w_fc)                                   # (in, 49)
    bfc = b_fc[None, :]                                         # (1, 49)

    # Fused head weight: value columns first, then advantage columns (flat
    # action-major, support-minor — exactly torch's output-feature order).
    wheads = jnp.concatenate([jnp.transpose(w_val), jnp.transpose(w_adv)],
                             axis=1)                            # (49, S + A*S)
    bheads = jnp.concatenate([b_val, b_adv])[None, :]           # (1, S + A*S)

    # Fold dueling combine:  z = h @ (W_heads @ D) + (b_heads @ D)
    d = _dueling_fold_matrix(A, S)                              # (S + A*S, A*S)
    wz = wheads @ d                                             # (49, A*S)
    bz = bheads @ d                                             # (1, A*S)

    g = _group_matrix(A, S)                                     # (A*S, A)
    gt = jnp.transpose(g)                                       # (A, A*S)
    return (wfc, bfc, wz, bz, g, gt)


# ------------------------------ pure-JAX reference ------------------------------
def qnet_reference(x, raw):
    w_fc, b_fc, w_adv, b_adv, w_val, b_val = raw
    h = jnp.maximum(x @ w_fc.T + b_fc, 0.0)
    val = (h @ w_val.T + b_val).reshape(-1, 1, NUM_SUPPORT)
    adv = (h @ w_adv.T + b_adv).reshape(-1, NUM_OUTPUTS, NUM_SUPPORT)
    z = val + (adv - adv.mean(axis=1, keepdims=True))
    return jax.nn.softmax(z, axis=2)


if __name__ == "__main__":
    key = jax.random.PRNGKey(0)
    k_param, k_x = jax.random.split(key)
    raw_params = init_raw_params(k_param)
    kernel_params = pack_kernel_params(raw_params)
    x = jax.random.normal(k_x, (BATCH, NUM_INPUTS), jnp.float32)

    p = qnet_forward(x, kernel_params)
    p = jax.block_until_ready(p)

    p_ref = qnet_reference(x, raw_params)
    assert p.shape == (BATCH, NUM_OUTPUTS, NUM_SUPPORT)
    assert jnp.allclose(p, p_ref, atol=1e-5, rtol=1e-5), "mismatch vs reference"
    # softmax rows sum to 1
    assert jnp.allclose(jnp.sum(p, axis=2), 1.0, atol=1e-5)

    print("KERNEL_OK")
</pallas_src>

<mosaic_0001>
module attributes {stable_mosaic.version = 11 : i64} {
  func.func @_qnet_kernel(%arg0: memref<2x8xf32, #tpu.memory_space<vmem>>, %arg1: memref<8x49xf32, #tpu.memory_space<vmem>>, %arg2: memref<1x49xf32, #tpu.memory_space<vmem>>, %arg3: memref<49x32xf32, #tpu.memory_space<vmem>>, %arg4: memref<1x32xf32, #tpu.memory_space<vmem>>, %arg5: memref<32x4xf32, #tpu.memory_space<vmem>>, %arg6: memref<4x32xf32, #tpu.memory_space<vmem>>, %arg7: memref<2x32xf32, #tpu.memory_space<vmem>>) attributes {dimension_semantics = [], scalar_prefetch = 0 : i64, scratch_operands = 0 : i64, tpu.core_type = #tpu.core_type<tc>} {
    %c0 = arith.constant 0 : index
    %c0_0 = arith.constant 0 : index
    %0 = vector.load %arg0[%c0, %c0_0] : memref<2x8xf32, #tpu.memory_space<vmem>>, vector<2x8xf32>
    %c0_1 = arith.constant 0 : index
    %c0_2 = arith.constant 0 : index
    %1 = vector.load %arg1[%c0_1, %c0_2] : memref<8x49xf32, #tpu.memory_space<vmem>>, vector<8x49xf32>
    %cst = arith.constant dense<0.000000e+00> : vector<2x49xf32>
    %2 = tpu.matmul %0, %1, %cst {dimension_numbers = #tpu.dot_dimension_numbers<[1], [0], [0], [1], [0, 0, 1, 1], [], []>} : vector<2x8xf32>, vector<8x49xf32>, vector<2x49xf32> -> vector<2x49xf32>
    %c0_3 = arith.constant 0 : index
    %c0_4 = arith.constant 0 : index
    %3 = vector.load %arg2[%c0_3, %c0_4] : memref<1x49xf32, #tpu.memory_space<vmem>>, vector<1x49xf32>
    %4 = vector.broadcast %3 : vector<1x49xf32> to vector<2x49xf32>
    %5 = arith.addf %2, %4 : vector<2x49xf32>
    %cst_5 = arith.constant 0.000000e+00 : f32
    %6 = vector.broadcast %cst_5 : f32 to vector<2x49xf32>
    %7 = arith.maximumf %5, %6 : vector<2x49xf32>
    %c0_6 = arith.constant 0 : index
    %c0_7 = arith.constant 0 : index
    %8 = vector.load %arg3[%c0_6, %c0_7] : memref<49x32xf32, #tpu.memory_space<vmem>>, vector<49x32xf32>
    %cst_8 = arith.constant dense<0.000000e+00> : vector<2x32xf32>
    %9 = tpu.matmul %7, %8, %cst_8 {dimension_numbers = #tpu.dot_dimension_numbers<[1], [0], [0], [1], [0, 0, 1, 1], [], []>} : vector<2x49xf32>, vector<49x32xf32>, vector<2x32xf32> -> vector<2x32xf32>
    %c0_9 = arith.constant 0 : index
    %c0_10 = arith.constant 0 : index
    %10 = vector.load %arg4[%c0_9, %c0_10] : memref<1x32xf32, #tpu.memory_space<vmem>>, vector<1x32xf32>
    %11 = vector.broadcast %10 : vector<1x32xf32> to vector<2x32xf32>
    %12 = arith.addf %9, %11 : vector<2x32xf32>
    %cst_11 = arith.constant dense<0xFF800000> : vector<2xf32>
    %13 = vector.multi_reduction <maximumf>, %12, %cst_11 [1] : vector<2x32xf32> to vector<2xf32>
    %14 = vector.shape_cast %13 : vector<2xf32> to vector<2x1xf32>
    %15 = vector.broadcast %14 : vector<2x1xf32> to vector<2x32xf32>
    %16 = arith.subf %12, %15 : vector<2x32xf32>
    %17 = math.exp %16 : vector<2x32xf32>
    %c0_12 = arith.constant 0 : index
    %c0_13 = arith.constant 0 : index
    %18 = vector.load %arg5[%c0_12, %c0_13] : memref<32x4xf32, #tpu.memory_space<vmem>>, vector<32x4xf32>
    %cst_14 = arith.constant dense<0.000000e+00> : vector<2x4xf32>
    %19 = tpu.matmul %17, %18, %cst_14 {dimension_numbers = #tpu.dot_dimension_numbers<[1], [0], [0], [1], [0, 0, 1, 1], [], []>} : vector<2x32xf32>, vector<32x4xf32>, vector<2x4xf32> -> vector<2x4xf32>
    %20 = tpu.reciprocal %19 : vector<2x4xf32> -> vector<2x4xf32>
    %c0_15 = arith.constant 0 : index
    %c0_16 = arith.constant 0 : index
    %21 = vector.load %arg6[%c0_15, %c0_16] : memref<4x32xf32, #tpu.memory_space<vmem>>, vector<4x32xf32>
    %cst_17 = arith.constant dense<0.000000e+00> : vector<2x32xf32>
    %22 = tpu.matmul %20, %21, %cst_17 {dimension_numbers = #tpu.dot_dimension_numbers<[1], [0], [0], [1], [0, 0, 1, 1], [], []>} : vector<2x4xf32>, vector<4x32xf32>, vector<2x32xf32> -> vector<2x32xf32>
    %23 = arith.mulf %17, %22 : vector<2x32xf32>
    %c0_18 = arith.constant 0 : index
    %c0_19 = arith.constant 0 : index
    %24 = vector.load %arg7[%c0_18, %c0_19] : memref<2x32xf32, #tpu.memory_space<vmem>>, vector<2x32xf32>
    tpu.vector_store %arg7[%c0_18, %c0_19], %23 {strides = array<i32>} : memref<2x32xf32, #tpu.memory_space<vmem>>, vector<2x32xf32>,
    return
  }
}

</mosaic_0001>

<llo_original>
// kernel: tpu_custom_call.1
$region0: #{tpu_custom_call.1}
  #allocation0 [shape = 'u32[]', space=smem, size = 0x4, offset = 0x4, fixed_abs, tag = 'smem constant byte address 0x4 - core index']
  #allocation1 [shape = 'u32[72,128]{1,0:T(1,128)}', space=vmem, size = 0x9000, scoped, tag = 'internal scratch']
  %s0 = inlined_call_operand.vmem [shape: f32[2,8], index: 0, kind: input, shape index: {}]
  %s1 = inlined_call_operand.vmem [shape: f32[8,49], index: 1, kind: input, shape index: {}]
  %s2 = inlined_call_operand.vmem [shape: f32[1,49], index: 2, kind: input, shape index: {}]
  %s3 = inlined_call_operand.vmem [shape: f32[49,32], index: 3, kind: input, shape index: {}]
  %s4 = inlined_call_operand.vmem [shape: f32[1,32], index: 4, kind: input, shape index: {}]
  %s5 = inlined_call_operand.vmem [shape: f32[32,4], index: 5, kind: input, shape index: {}]
  %s6 = inlined_call_operand.vmem [shape: f32[4,32], index: 6, kind: input, shape index: {}]
  %s7 = inlined_call_operand.hbm [shape: f32[2,32], index: 7, kind: output, shape index: {}]
  %s8 = sld [smem:[#allocation0]]
  $region38: #{tpu_custom_call.1} parent=0
    _
  %s10 = ssub.s32 1, %s8
  %s11 = scalar_select 0, %s10, %s8
  $region1: #{tpu_custom_call.1} parent=0
    #allocation2 [shape = 'u8[1024]{0}', space=vmem, size = 0x400, scoped, tag = 'output window, operand 0, single buffered']
    #allocation3 [shape = 's32[1]{0}', space=sflag, size = 0x4, scoped, tag = 'scoped memory for tpu_custom_call.1']
    %12 = vsyncpa [#allocation3], 0
    // Predicated region
    $region2: #{tpu_custom_call.1} parent=1 // pred_check
      _
    $region3: #{tpu_custom_call.1} parent=1 // pred_check_branch
      %14 = sbr.rel (0) target = $region5
    $region4: #{tpu_custom_call.1} parent=1 // pred_region
      _
    $region5: #{tpu_custom_call.1} parent=1 // pred_fallthru
      _
    // Predicated region
    $region6: #{tpu_custom_call.1} parent=1 // pred_check
      _
    $region7: #{tpu_custom_call.1} parent=1 // pred_check_branch
      %16 = sbr.rel (0) target = $region9
    $region8: #{tpu_custom_call.1} parent=1 // pred_region
      _
    $region9: #{tpu_custom_call.1} parent=1 // pred_fallthru
      _
    // Predicated region
    $region10: #{tpu_custom_call.1} parent=1 // pred_check
      _
    $region11: #{tpu_custom_call.1} parent=1 // pred_check_branch
      %18 = sbr.rel (0) target = $region13
    $region12: #{tpu_custom_call.1} parent=1 // pred_region
      _
    $region13: #{tpu_custom_call.1} parent=1 // pred_fallthru
      _
    // Predicated region
    $region14: #{tpu_custom_call.1} parent=1 // pred_check
      _
    $region15: #{tpu_custom_call.1} parent=1 // pred_check_branch
      %20 = sbr.rel (0) target = $region17
    $region16: #{tpu_custom_call.1} parent=1 // pred_region
      _
    $region17: #{tpu_custom_call.1} parent=1 // pred_fallthru
      _
    // Predicated region
    $region18: #{tpu_custom_call.1} parent=1 // pred_check
      _
    $region19: #{tpu_custom_call.1} parent=1 // pred_check_branch
      %22 = sbr.rel (0) target = $region21
    $region20: #{tpu_custom_call.1} parent=1 // pred_region
      _
    $region21: #{tpu_custom_call.1} parent=1 // pred_fallthru
      _
    // Predicated region
    $region22: #{tpu_custom_call.1} parent=1 // pred_check
      _
    $region23: #{tpu_custom_call.1} parent=1 // pred_check_branch
      %24 = sbr.rel (0) target = $region25
    $region24: #{tpu_custom_call.1} parent=1 // pred_region
      _
    $region25: #{tpu_custom_call.1} parent=1 // pred_fallthru
      _
    // Predicated region
    $region26: #{tpu_custom_call.1} parent=1 // pred_check
      _
    $region27: #{tpu_custom_call.1} parent=1 // pred_check_branch
      %26 = sbr.rel (0) target = $region29
    $region28: #{tpu_custom_call.1} parent=1 // pred_region
      _
    $region29: #{tpu_custom_call.1} parent=1 // pred_fallthru
      _
    %v27 = vld [vmem:[%s0] sm:$0x3]
    %v28 = vld [vmem:[%s1] sm:$0xff]
    %v29 = vld [vmem:[%s2] sm:$0x1]
    %v31 = vperm.slane %v29, 0
    %vm33 = vcmask 64512
    %v35 = vsel %vm33, %v27, 0
    %37 = vmatpush.msra.mxu0 0.0
    %38 = vmatpush.msra.mxu0 0.0
    %39 = vmatpush.msra.mxu0 0.0
    %40 = vmatpush.msra.mxu0 0.0
    %41 = vmatpush.msra.mxu0 0.0
    %42 = vmatpush.msra.mxu0 0.0
    %43 = vmatpush.msra.mxu0 0.0
    %44 = vmatpush.msra.mxu0 0.0
    %45 = vmatpush.msra.mxu0 0.0
    %46 = vmatpush.msra.mxu0 0.0
    %47 = vmatpush.msra.mxu0 0.0
    %48 = vmatpush.msra.mxu0 0.0
    %49 = vmatpush.msra.mxu0 0.0
    %50 = vmatpush.msra.mxu0 0.0
    %51 = vmatpush.msra.mxu0 0.0
    %52 = vmatpush.msra.mxu0 %v28
    %53 = vmatmul.f32.gmra.mxu0 %v35
    %v54 = vpop.f32.mrf.mxu0
    %v55 = vadd.f32 %v31, %v54
    %56 = vdwg.mxu0
    %v57 = vmax.f32 %v55, 0.0
    %v58 = vld [vmem:[%s3] sm:$0xff]
    %v59 = vld [vmem:[%s3 + $0x8] sm:$0xff]
    %v60 = vld [vmem:[%s3 + $0x10] sm:$0xff]
    %v61 = vld [vmem:[%s3 + $0x18] sm:$0xff]
    %v62 = vld [vmem:[%s3 + $0x20] sm:$0xff]
    %v63 = vld [vmem:[%s3 + $0x28] sm:$0xff]
    %v64 = vld [vmem:[%s3 + $0x30] sm:$0x1]
    %v65 = vld [vmem:[%s4] sm:$0x1]
    %v67 = vperm.slane %v65, 0
    %vm69 = vcmask 400384
    %v71 = vsel %vm69, %v57, 0
    %vm73 = vcmask 1040384
    %v75 = vsel %vm73, %v64, 0
    %77 = vmatpush.msra.mxu0 0.0
    %78 = vmatpush.msra.mxu0 0.0
    %79 = vmatpush.msra.mxu0 0.0
    %80 = vmatpush.msra.mxu0 0.0
    %81 = vmatpush.msra.mxu0 0.0
    %82 = vmatpush.msra.mxu0 0.0
    %83 = vmatpush.msra.mxu0 0.0
    %84 = vmatpush.msra.mxu0 0.0
    %85 = vmatpush.msra.mxu0 0.0
    %86 = vmatpush.msra.mxu0 %v75
    %87 = vmatpush.msra.mxu0 %v63
    %88 = vmatpush.msra.mxu0 %v62
    %89 = vmatpush.msra.mxu0 %v61
    %90 = vmatpush.msra.mxu0 %v60
    %91 = vmatpush.msra.mxu0 %v59
    %92 = vmatpush.msra.mxu0 %v58
    %93 = vmatmul.f32.gmra.mxu0 %v71
    %v94 = vpop.f32.mrf.mxu0
    %v95 = vadd.f32 %v67, %v94
    %96 = vdwg.mxu0
    %vm97 = vcmask 254976
    %v98 = vsel %vm97, %v95, -inf
    %99 = vmax.xlane.f32.xlu0 %v98
    %v100 = vpop.xlane.xlu0 %99
    %v101 = vsub.f32 %v95, %v100
    %v102 = vmul.f32 %v101, 1.442695
    %v103 = vpow.pop %v102
    %v104 = vld [vmem:[%s5] sm:$0xff]
    %v105 = vld [vmem:[%s5 + $0x8] sm:$0xff]
    %v106 = vld [vmem:[%s5 + $0x10] sm:$0xff]
    %v107 = vld [vmem:[%s5 + $0x18] sm:$0xff]
    %vm108 = vcmask 261120
    %v110 = vsel %vm108, %v103, 0
    %112 = vmatpush.msra.mxu0 0.0
    %113 = vmatpush.msra.mxu0 0.0
    %114 = vmatpush.msra.mxu0 0.0
    %115 = vmatpush.msra.mxu0 0.0
    %116 = vmatpush.msra.mxu0 0.0
    %117 = vmatpush.msra.mxu0 0.0
    %118 = vmatpush.msra.mxu0 0.0
    %119 = vmatpush.msra.mxu0 0.0
    %120 = vmatpush.msra.mxu0 0.0
    %121 = vmatpush.msra.mxu0 0.0
    %122 = vmatpush.msra.mxu0 0.0
    %123 = vmatpush.msra.mxu0 0.0
    %124 = vmatpush.msra.mxu0 %v107
    %125 = vmatpush.msra.mxu0 %v106
    %126 = vmatpush.msra.mxu0 %v105
    %127 = vmatpush.msra.mxu0 %v104
    %128 = vmatmul.f32.gmra.mxu0 %v110
    %v129 = vpop.f32.mrf.mxu0
    %v130 = vadd.f32 0.0, %v129
    %131 = vdwg.mxu0
    %v132 = vrcp.pop %v130
    %v133 = vmul.f32 %v130, %v132
    %v134 = vsub.f32 1.0, %v133
    %v135 = vmul.f32 %v132, %v134
    %v136 = vadd.f32 %v132, %v135
    %vm137 = vweird.f32 %v130
    %vm138 = vweird.f32 %v132
    %vm139 = vmor %vm137, %vm138
    %v140 = vsel %vm139, %v132, %v136
    %v141 = vand.u32 2147483647, %v130
    %vm142 = vcmp.eq.f32.partialorder %v141, 8.507059e+37
    %v143 = vand.u32 %v130, 2147483648
    %v144 = vor.u32 1.1754944e-38, %v143
    %v145 = vsel %vm142, %v144, %v140
    %v146 = vld [vmem:[%s6] sm:$0xf]
    %vm147 = vcmask 31744
    %v149 = vsel %vm147, %v145, 0
    %vm151 = vcmask 1043456
    %v153 = vsel %vm151, %v146, 0
    %155 = vmatpush.msra.mxu0 0.0
    %156 = vmatpush.msra.mxu0 0.0
    %157 = vmatpush.msra.mxu0 0.0
    %158 = vmatpush.msra.mxu0 0.0
    %159 = vmatpush.msra.mxu0 0.0
    %160 = vmatpush.msra.mxu0 0.0
    %161 = vmatpush.msra.mxu0 0.0
    %162 = vmatpush.msra.mxu0 0.0
    %163 = vmatpush.msra.mxu0 0.0
    %164 = vmatpush.msra.mxu0 0.0
    %165 = vmatpush.msra.mxu0 0.0
    %166 = vmatpush.msra.mxu0 0.0
    %167 = vmatpush.msra.mxu0 0.0
    %168 = vmatpush.msra.mxu0 0.0
    %169 = vmatpush.msra.mxu0 0.0
    %170 = vmatpush.msra.mxu0 %v153
    %171 = vmatmul.f32.gmra.mxu0 %v149
    %v172 = vpop.f32.mrf.mxu0
    %v173 = vadd.f32 0.0, %v172
    %174 = vdwg.mxu0
    %v175 = vmul.f32 %v103, %v173
    %176 = vst.msk [vmem:[#allocation2] sm:$0x3] %vm97, %v175
    // Predicated region
    $region30: #{tpu_custom_call.1} parent=1 // pred_check
      _
    $region31: #{tpu_custom_call.1} parent=1 // pred_check_branch
      %178 = sbr.rel (0) target = $region33
    $region32: #{tpu_custom_call.1} parent=1 // pred_region
      %180 = vsyncadd [#allocation3], 0
      %s182 = sshll.u32 [#allocation2], 4
      %s183 = int_to_ptr.vmem [resolvable:$true] %s182
      %s184 = sshll.u32 %s7, 4
      %s185 = int_to_ptr.hbm [resolvable:$true] %s184
      %187 = dma.vmem_to_hbm [thread:$0]  %s183, 32, %s185, [#allocation3]
    $region33: #{tpu_custom_call.1} parent=1 // pred_fallthru
      _
    // Predicated region
    $region34: #{tpu_custom_call.1} parent=1 // pred_check
      _
    $region35: #{tpu_custom_call.1} parent=1 // pred_check_branch
      %189 = sbr.rel (0) target = $region37
    $region36: #{tpu_custom_call.1} parent=1 // pred_region
      %191 = dma.done [#allocation3], 32
    $region37: #{tpu_custom_call.1} parent=1 // pred_fallthru
      _
    %192 = vsyncpa [#allocation3], 1

</llo_original>
